<compile_context>
chip_gen: v6e
topology: v6e:2x2x1
jax: 0.10.0
libtpu: 0.0.40
codegen_flags: <defaults>
</compile_context>

<pallas_src>
import math

import jax
import jax.numpy as jnp
from jax.experimental import pallas as pl
from jax.experimental.pallas import tpu as pltpu


def dueling_q_kernel(
    x_ref,
    w1_ref, b1_ref,
    w2_ref, b2_ref,
    wh_ref, bh_ref,     # fused head-hidden weights [fc2, Hv+Ha], bias [1, Hv+Ha]
    wo_ref, bo_ref,     # block-diagonal output weights [Hv+Ha, A+1], bias [1, A+1]
    out_ref,
):
    x = x_ref[...]

    # Shared trunk: two ReLU-activated linear layers (MXU matmuls, f32 accum).
    h1 = jnp.maximum(
        jnp.dot(x, w1_ref[...], preferred_element_type=jnp.float32) + b1_ref[...],
        0.0,
    )
    h2 = jnp.maximum(
        jnp.dot(h1, w2_ref[...], preferred_element_type=jnp.float32) + b2_ref[...],
        0.0,
    )

    # Fused value/advantage hidden layer: one [fc2, Hv+Ha] matmul.
    hh = jnp.maximum(
        jnp.dot(h2, wh_ref[...], preferred_element_type=jnp.float32) + bh_ref[...],
        0.0,
    )

    # Fused value/advantage projection via block-diagonal weights:
    # lanes [0, A) hold adv (lane-0-aligned, no cross-lane shift before the
    # row-max), lane A holds val.
    va = jnp.dot(hh, wo_ref[...], preferred_element_type=jnp.float32) + bo_ref[...]
    A = out_ref.shape[-1]
    adv = va[:, :A]          # [B, A]
    val = va[:, A:A + 1]     # [B, 1] (broadcasts anyway)

    # qsa = val + adv - max_a(adv)   (per-row only; safe with masked partial blocks)
    adv_max = jnp.max(adv, axis=1, keepdims=True)
    out_ref[...] = (val + adv - adv_max).astype(out_ref.dtype)


def prepare_fused_params(params):
    """Build the fused weight tuple used by the kernel.

    Call ONCE whenever the underlying params change (e.g. per optimizer step /
    target-network sync) and reuse the result across forward calls — this
    removes all fusion work from the per-call path.
    """
    dtype = params["w1"].dtype
    wvh, wah = params["wvh"], params["wah"]
    hv, ha = wvh.shape[1], wah.shape[1]
    a = params["wa"].shape[1]

    w_head = jnp.concatenate([wvh, wah], axis=1).astype(dtype)               # [fc2, Hv+Ha]
    b_head = jnp.concatenate([params["bvh"], params["bah"]], axis=1).astype(dtype)

    # Block-diagonal output: adv columns first (lanes [0, A)), val in lane A.
    w_out = jnp.zeros((hv + ha, a + 1), dtype)
    w_out = w_out.at[hv:, :a].set(params["wa"])                              # adv block
    w_out = w_out.at[:hv, a:].set(params["wv"])                              # val column
    b_out = jnp.concatenate([params["ba"], params["bv"]], axis=1).astype(dtype)

    return (
        params["w1"], params["b1"],
        params["w2"], params["b2"],
        w_head, b_head,
        w_out, b_out,
    )


def _full_spec(shape):
    """Whole-array BlockSpec for a grid-less call."""
    return pl.BlockSpec(shape, lambda: (0,) * len(shape))


def dueling_q_forward(x, fused_weights, *, batch_tile=1024, single_block_max=256):
    """Run the dueling Q-network forward pass as a Pallas kernel.

    x: [B, state_size] float32
    fused_weights: output of prepare_fused_params(params)

    Small batches (B <= single_block_max) run as a single resident block;
    larger batches are tiled over the batch dimension with grid = cdiv(B, TB)
    (no padding; the partial last block is masked by Pallas). Weights stay
    resident across grid steps and the batch axis is "parallel" (megacore /
    v7x two-TC sharding), so TB is capped at ceil(B/2) to keep >= 2 steps.
    """
    B, S = x.shape
    A = fused_weights[-1].shape[1] - 1   # b_out is [1, A+1]

    if B <= single_block_max:
        # Single block: everything fits comfortably in VMEM (~110 KB).
        in_specs = [_full_spec(x.shape)] + [_full_spec(w.shape) for w in fused_weights]
        return pl.pallas_call(
            dueling_q_kernel,
            out_shape=jax.ShapeDtypeStruct((B, A), jnp.float32),
            grid=(),
            in_specs=in_specs,
            out_specs=_full_spec((B, A)),
        )(x, *fused_weights)

    # Batched path: adaptive tile, no padding.
    # Cap at ceil(B/2) rounded up to a multiple of 8 so the grid has >= 2
    # parallel steps (v7x dual TensorCore) while tiles stay as large as allowed.
    half = ((B + 1) // 2 + 7) // 8 * 8
    TB = min(batch_tile, half)
    grid = pl.cdiv(B, TB)

    x_spec = pl.BlockSpec((TB, S), lambda i: (i, 0))
    # Weight blocks are constant across grid steps -> stay resident in VMEM.
    w_specs = [pl.BlockSpec(w.shape, lambda i: (0, 0)) for w in fused_weights]
    out_spec = pl.BlockSpec((TB, A), lambda i: (i, 0))

    return pl.pallas_call(
        dueling_q_kernel,
        out_shape=jax.ShapeDtypeStruct((B, A), jnp.float32),
        grid=(grid,),
        in_specs=[x_spec] + w_specs,
        out_specs=out_spec,
        compiler_params=pltpu.CompilerParams(
            dimension_semantics=("parallel",),
        ),
    )(x, *fused_weights)


def init_params(key, state_size, action_size, fc1_size=128, fc2_size=128,
                fc_val_hidden_size=32, fc_adv_hidden_size=32):
    """PyTorch-style (uniform +-1/sqrt(fan_in)) init. Weights [in, out], biases [1, out]."""
    layer_dims = [
        ("w1", "b1", state_size, fc1_size),
        ("w2", "b2", fc1_size, fc2_size),
        ("wvh", "bvh", fc2_size, fc_val_hidden_size),
        ("wv", "bv", fc_val_hidden_size, 1),
        ("wah", "bah", fc2_size, fc_adv_hidden_size),
        ("wa", "ba", fc_adv_hidden_size, action_size),
    ]
    params = {}
    keys = jax.random.split(key, 2 * len(layer_dims))
    for i, (wname, bname, fan_in, fan_out) in enumerate(layer_dims):
        bound = 1.0 / math.sqrt(fan_in)
        params[wname] = jax.random.uniform(
            keys[2 * i], (fan_in, fan_out), jnp.float32, -bound, bound)
        params[bname] = jax.random.uniform(
            keys[2 * i + 1], (1, fan_out), jnp.float32, -bound, bound)
    return params


def reference_forward(x, params):
    """Pure-JAX reference of the PyTorch forward, for correctness checking."""
    h1 = jax.nn.relu(x @ params["w1"] + params["b1"])
    h2 = jax.nn.relu(h1 @ params["w2"] + params["b2"])
    vh = jax.nn.relu(h2 @ params["wvh"] + params["bvh"])
    val = vh @ params["wv"] + params["bv"]
    ah = jax.nn.relu(h2 @ params["wah"] + params["bah"])
    adv = ah @ params["wa"] + params["ba"]
    return val + adv - jnp.max(adv, axis=1, keepdims=True)


if __name__ == "__main__":
    state_size, action_size = 16, 4

    key = jax.random.PRNGKey(0)
    pkey, xkey1, xkey2, xkey3 = jax.random.split(key, 4)
    params = init_params(pkey, state_size, action_size)

    # Fuse weights ONCE (reused across all forward calls until params change).
    fused = prepare_fused_params(params)

    # Small (per-env-step) batch: single-block path.
    x_small = jax.random.normal(xkey1, (8, state_size), jnp.float32)
    q_small = jax.block_until_ready(dueling_q_forward(x_small, fused))
    ref_small = reference_forward(x_small, params)
    assert q_small.shape == (8, action_size)
    assert jnp.allclose(q_small, ref_small, atol=1e-4, rtol=1e-4), "small-batch mismatch"

    # Replay-buffer-style batch, divides evenly: 384 rows -> 2 tiles of 192.
    x_big = jax.random.normal(xkey2, (384, state_size), jnp.float32)
    q_big = jax.block_until_ready(dueling_q_forward(x_big, fused))
    ref_big = reference_forward(x_big, params)
    assert q_big.shape == (384, action_size)
    assert jnp.allclose(q_big, ref_big, atol=1e-4, rtol=1e-4), "big-batch mismatch"

    # Non-divisible batch: 1000 rows -> TB=504, grid=2, partial last block
    # (exercises masked writes; no host-side pad/slice round trip).
    x_odd = jax.random.normal(xkey3, (1000, state_size), jnp.float32)
    q_odd = jax.block_until_ready(dueling_q_forward(x_odd, fused))
    ref_odd = reference_forward(x_odd, params)
    assert q_odd.shape == (1000, action_size)
    assert jnp.allclose(q_odd, ref_odd, atol=1e-4, rtol=1e-4), "odd-batch mismatch"

    print("KERNEL_OK")
</pallas_src>

<mosaic_0001>
module attributes {stable_mosaic.version = 11 : i64} {
  func.func @dueling_q_kernel(%arg0: memref<8x16xf32, #tpu.memory_space<vmem>>, %arg1: memref<16x128xf32, #tpu.memory_space<vmem>>, %arg2: memref<1x128xf32, #tpu.memory_space<vmem>>, %arg3: memref<128x128xf32, #tpu.memory_space<vmem>>, %arg4: memref<1x128xf32, #tpu.memory_space<vmem>>, %arg5: memref<128x64xf32, #tpu.memory_space<vmem>>, %arg6: memref<1x64xf32, #tpu.memory_space<vmem>>, %arg7: memref<64x5xf32, #tpu.memory_space<vmem>>, %arg8: memref<1x5xf32, #tpu.memory_space<vmem>>, %arg9: memref<8x4xf32, #tpu.memory_space<vmem>>) attributes {dimension_semantics = [], scalar_prefetch = 0 : i64, scratch_operands = 0 : i64, tpu.core_type = #tpu.core_type<tc>} {
    %c0 = arith.constant 0 : index
    %c0_0 = arith.constant 0 : index
    %0 = vector.load %arg0[%c0, %c0_0] : memref<8x16xf32, #tpu.memory_space<vmem>>, vector<8x16xf32>
    %c0_1 = arith.constant 0 : index
    %c0_2 = arith.constant 0 : index
    %1 = vector.load %arg1[%c0_1, %c0_2] : memref<16x128xf32, #tpu.memory_space<vmem>>, vector<16x128xf32>
    %cst = arith.constant dense<0.000000e+00> : vector<8x128xf32>
    %2 = tpu.matmul %0, %1, %cst {dimension_numbers = #tpu.dot_dimension_numbers<[1], [0], [0], [1], [0, 0, 1, 1], [], []>} : vector<8x16xf32>, vector<16x128xf32>, vector<8x128xf32> -> vector<8x128xf32>
    %c0_3 = arith.constant 0 : index
    %c0_4 = arith.constant 0 : index
    %3 = vector.load %arg2[%c0_3, %c0_4] : memref<1x128xf32, #tpu.memory_space<vmem>>, vector<1x128xf32>
    %4 = vector.broadcast %3 : vector<1x128xf32> to vector<8x128xf32>
    %5 = arith.addf %2, %4 : vector<8x128xf32>
    %cst_5 = arith.constant 0.000000e+00 : f32
    %6 = vector.broadcast %cst_5 : f32 to vector<8x128xf32>
    %7 = arith.maximumf %5, %6 : vector<8x128xf32>
    %c0_6 = arith.constant 0 : index
    %c0_7 = arith.constant 0 : index
    %8 = vector.load %arg3[%c0_6, %c0_7] : memref<128x128xf32, #tpu.memory_space<vmem>>, vector<128x128xf32>
    %cst_8 = arith.constant dense<0.000000e+00> : vector<8x128xf32>
    %9 = tpu.matmul %7, %8, %cst_8 {dimension_numbers = #tpu.dot_dimension_numbers<[1], [0], [0], [1], [0, 0, 1, 1], [], []>} : vector<8x128xf32>, vector<128x128xf32>, vector<8x128xf32> -> vector<8x128xf32>
    %c0_9 = arith.constant 0 : index
    %c0_10 = arith.constant 0 : index
    %10 = vector.load %arg4[%c0_9, %c0_10] : memref<1x128xf32, #tpu.memory_space<vmem>>, vector<1x128xf32>
    %11 = vector.broadcast %10 : vector<1x128xf32> to vector<8x128xf32>
    %12 = arith.addf %9, %11 : vector<8x128xf32>
    %cst_11 = arith.constant 0.000000e+00 : f32
    %13 = vector.broadcast %cst_11 : f32 to vector<8x128xf32>
    %14 = arith.maximumf %12, %13 : vector<8x128xf32>
    %c0_12 = arith.constant 0 : index
    %c0_13 = arith.constant 0 : index
    %15 = vector.load %arg5[%c0_12, %c0_13] : memref<128x64xf32, #tpu.memory_space<vmem>>, vector<128x64xf32>
    %cst_14 = arith.constant dense<0.000000e+00> : vector<8x64xf32>
    %16 = tpu.matmul %14, %15, %cst_14 {dimension_numbers = #tpu.dot_dimension_numbers<[1], [0], [0], [1], [0, 0, 1, 1], [], []>} : vector<8x128xf32>, vector<128x64xf32>, vector<8x64xf32> -> vector<8x64xf32>
    %c0_15 = arith.constant 0 : index
    %c0_16 = arith.constant 0 : index
    %17 = vector.load %arg6[%c0_15, %c0_16] : memref<1x64xf32, #tpu.memory_space<vmem>>, vector<1x64xf32>
    %18 = vector.broadcast %17 : vector<1x64xf32> to vector<8x64xf32>
    %19 = arith.addf %16, %18 : vector<8x64xf32>
    %cst_17 = arith.constant 0.000000e+00 : f32
    %20 = vector.broadcast %cst_17 : f32 to vector<8x64xf32>
    %21 = arith.maximumf %19, %20 : vector<8x64xf32>
    %c0_18 = arith.constant 0 : index
    %c0_19 = arith.constant 0 : index
    %22 = vector.load %arg7[%c0_18, %c0_19] : memref<64x5xf32, #tpu.memory_space<vmem>>, vector<64x5xf32>
    %cst_20 = arith.constant dense<0.000000e+00> : vector<8x5xf32>
    %23 = tpu.matmul %21, %22, %cst_20 {dimension_numbers = #tpu.dot_dimension_numbers<[1], [0], [0], [1], [0, 0, 1, 1], [], []>} : vector<8x64xf32>, vector<64x5xf32>, vector<8x5xf32> -> vector<8x5xf32>
    %c0_21 = arith.constant 0 : index
    %c0_22 = arith.constant 0 : index
    %24 = vector.load %arg8[%c0_21, %c0_22] : memref<1x5xf32, #tpu.memory_space<vmem>>, vector<1x5xf32>
    %25 = vector.broadcast %24 : vector<1x5xf32> to vector<8x5xf32>
    %26 = arith.addf %23, %25 : vector<8x5xf32>
    %27 = vector.extract_strided_slice %26 {offsets = [0, 0], sizes = [8, 4], strides = [1, 1]} : vector<8x5xf32> to vector<8x4xf32>
    %28 = vector.extract_strided_slice %26 {offsets = [0, 4], sizes = [8, 1], strides = [1, 1]} : vector<8x5xf32> to vector<8x1xf32>
    %cst_23 = arith.constant dense<0xFF800000> : vector<8xf32>
    %29 = vector.multi_reduction <maximumf>, %27, %cst_23 [1] : vector<8x4xf32> to vector<8xf32>
    %30 = vector.shape_cast %29 : vector<8xf32> to vector<8x1xf32>
    %31 = vector.broadcast %28 : vector<8x1xf32> to vector<8x4xf32>
    %32 = arith.addf %31, %27 : vector<8x4xf32>
    %33 = vector.broadcast %30 : vector<8x1xf32> to vector<8x4xf32>
    %34 = arith.subf %32, %33 : vector<8x4xf32>
    %c0_24 = arith.constant 0 : index
    %c0_25 = arith.constant 0 : index
    %35 = vector.load %arg9[%c0_24, %c0_25] : memref<8x4xf32, #tpu.memory_space<vmem>>, vector<8x4xf32>
    tpu.vector_store %arg9[%c0_24, %c0_25], %34 {strides = array<i32>} : memref<8x4xf32, #tpu.memory_space<vmem>>, vector<8x4xf32>,
    return
  }
}

</mosaic_0001>

<llo_original>
// kernel: tpu_custom_call.1
$region0: #{tpu_custom_call.1}
  #allocation0 [shape = 'u32[]', space=smem, size = 0x4, offset = 0x4, fixed_abs, tag = 'smem constant byte address 0x4 - core index']
  #allocation1 [shape = 'u32[144,128]{1,0:T(1,128)}', space=vmem, size = 0x12000, scoped, tag = 'internal scratch']
  %s0 = inlined_call_operand.vmem [shape: f32[8,16], index: 0, kind: input, shape index: {}]
  %s1 = inlined_call_operand.vmem [shape: f32[16,128], index: 1, kind: input, shape index: {}]
  %s2 = inlined_call_operand.vmem [shape: f32[1,128], index: 2, kind: input, shape index: {}]
  %s3 = inlined_call_operand.vmem [shape: f32[128,128], index: 3, kind: input, shape index: {}]
  %s4 = inlined_call_operand.vmem [shape: f32[1,128], index: 4, kind: input, shape index: {}]
  %s5 = inlined_call_operand.vmem [shape: f32[128,64], index: 5, kind: input, shape index: {}]
  %s6 = inlined_call_operand.vmem [shape: f32[1,64], index: 6, kind: input, shape index: {}]
  %s7 = inlined_call_operand.vmem [shape: f32[64,5], index: 7, kind: input, shape index: {}]
  %s8 = inlined_call_operand.vmem [shape: f32[1,5], index: 8, kind: input, shape index: {}]
  %s9 = inlined_call_operand.vmem [shape: f32[8,4], index: 9, kind: output, shape index: {}]
  %s10 = sld [smem:[#allocation0]]
  $region46: #{tpu_custom_call.1} parent=0
    _
  %s12 = ssub.s32 1, %s10
  %s13 = scalar_select 0, %s12, %s10
  // Predicated region
  $region2: #{tpu_custom_call.1} parent=0 // pred_check
    _
  $region3: #{tpu_custom_call.1} parent=0 // pred_check_branch
    %15 = sbr.rel (0) target = $region5
  $region4: #{tpu_custom_call.1} parent=0 // pred_region
    _
  $region5: #{tpu_custom_call.1} parent=0 // pred_fallthru
    _
  // Predicated region
  $region6: #{tpu_custom_call.1} parent=0 // pred_check
    _
  $region7: #{tpu_custom_call.1} parent=0 // pred_check_branch
    %17 = sbr.rel (0) target = $region9
  $region8: #{tpu_custom_call.1} parent=0 // pred_region
    _
  $region9: #{tpu_custom_call.1} parent=0 // pred_fallthru
    _
  // Predicated region
  $region10: #{tpu_custom_call.1} parent=0 // pred_check
    _
  $region11: #{tpu_custom_call.1} parent=0 // pred_check_branch
    %19 = sbr.rel (0) target = $region13
  $region12: #{tpu_custom_call.1} parent=0 // pred_region
    _
  $region13: #{tpu_custom_call.1} parent=0 // pred_fallthru
    _
  // Predicated region
  $region14: #{tpu_custom_call.1} parent=0 // pred_check
    _
  $region15: #{tpu_custom_call.1} parent=0 // pred_check_branch
    %21 = sbr.rel (0) target = $region17
  $region16: #{tpu_custom_call.1} parent=0 // pred_region
    _
  $region17: #{tpu_custom_call.1} parent=0 // pred_fallthru
    _
  // Predicated region
  $region18: #{tpu_custom_call.1} parent=0 // pred_check
    _
  $region19: #{tpu_custom_call.1} parent=0 // pred_check_branch
    %23 = sbr.rel (0) target = $region21
  $region20: #{tpu_custom_call.1} parent=0 // pred_region
    _
  $region21: #{tpu_custom_call.1} parent=0 // pred_fallthru
    _
  // Predicated region
  $region22: #{tpu_custom_call.1} parent=0 // pred_check
    _
  $region23: #{tpu_custom_call.1} parent=0 // pred_check_branch
    %25 = sbr.rel (0) target = $region25
  $region24: #{tpu_custom_call.1} parent=0 // pred_region
    _
  $region25: #{tpu_custom_call.1} parent=0 // pred_fallthru
    _
  // Predicated region
  $region26: #{tpu_custom_call.1} parent=0 // pred_check
    _
  $region27: #{tpu_custom_call.1} parent=0 // pred_check_branch
    %27 = sbr.rel (0) target = $region29
  $region28: #{tpu_custom_call.1} parent=0 // pred_region
    _
  $region29: #{tpu_custom_call.1} parent=0 // pred_fallthru
    _
  // Predicated region
  $region30: #{tpu_custom_call.1} parent=0 // pred_check
    _
  $region31: #{tpu_custom_call.1} parent=0 // pred_check_branch
    %29 = sbr.rel (0) target = $region33
  $region32: #{tpu_custom_call.1} parent=0 // pred_region
    _
  $region33: #{tpu_custom_call.1} parent=0 // pred_fallthru
    _
  // Predicated region
  $region34: #{tpu_custom_call.1} parent=0 // pred_check
    _
  $region35: #{tpu_custom_call.1} parent=0 // pred_check_branch
    %31 = sbr.rel (0) target = $region37
  $region36: #{tpu_custom_call.1} parent=0 // pred_region
    _
  $region37: #{tpu_custom_call.1} parent=0 // pred_fallthru
    _
  %v32 = vld [vmem:[%s0] sm:$0xff]
  %v33 = vld [vmem:[%s1] sm:$0xff]
  %v34 = vld [vmem:[%s1 + $0x8] sm:$0xff]
  %v35 = vld [vmem:[%s2] sm:$0x1]
  %v37 = vlaneseq
  %v38 = vshrl.u32 %v37, 7
  %v39 = vsub.s32 0, %v38
  %v40 = vrot.slane %v35, %v39
  %vm42 = vcmask 130048
  %v44 = vsel %vm42, %v32, 0
  %46 = vmatprep.subr.mxu0 0.0
  %47 = vmatpush1.msra.mxu0 0.0
  %48 = vmatprep.subr.mxu0 0.0
  %49 = vmatpush1.msra.mxu0 0.0
  %50 = vmatprep.subr.mxu0 0.0
  %51 = vmatpush1.msra.mxu0 0.0
  %52 = vmatprep.subr.mxu0 0.0
  %53 = vmatpush1.msra.mxu0 0.0
  %54 = vmatprep.subr.mxu0 0.0
  %55 = vmatpush1.msra.mxu0 0.0
  %56 = vmatprep.subr.mxu0 0.0
  %57 = vmatpush1.msra.mxu0 0.0
  %58 = vmatprep.subr.mxu0 0.0
  %59 = vmatpush1.msra.mxu0 0.0
  %60 = vmatprep.subr.mxu0 0.0
  %61 = vmatpush1.msra.mxu0 0.0
  %62 = vmatprep.subr.mxu0 0.0
  %63 = vmatpush1.msra.mxu0 0.0
  %64 = vmatprep.subr.mxu0 0.0
  %65 = vmatpush1.msra.mxu0 0.0
  %66 = vmatprep.subr.mxu0 0.0
  %67 = vmatpush1.msra.mxu0 0.0
  %68 = vmatprep.subr.mxu0 0.0
  %69 = vmatpush1.msra.mxu0 0.0
  %70 = vmatprep.subr.mxu0 0.0
  %71 = vmatpush1.msra.mxu0 0.0
  %72 = vmatprep.subr.mxu0 0.0
  %73 = vmatpush1.msra.mxu0 0.0
  %74 = vmatprep.subr.mxu0 0.0
  %75 = vmatpush1.msra.mxu0 %v34
  %76 = vmatprep.subr.mxu0 0.0
  %77 = vmatpush1.msra.mxu0 %v33
  %78 = vmatprep.subr.mxu0 0.0
  %79 = vmatpush2.msra.mxu0 0.0
  %80 = vmatprep.subr.mxu0 0.0
  %81 = vmatpush2.msra.mxu0 0.0
  %82 = vmatprep.subr.mxu0 0.0
  %83 = vmatpush2.msra.mxu0 0.0
  %84 = vmatprep.subr.mxu0 0.0
  %85 = vmatpush2.msra.mxu0 0.0
  %86 = vmatprep.subr.mxu0 0.0
  %87 = vmatpush2.msra.mxu0 0.0
  %88 = vmatprep.subr.mxu0 0.0
  %89 = vmatpush2.msra.mxu0 0.0
  %90 = vmatprep.subr.mxu0 0.0
  %91 = vmatpush2.msra.mxu0 0.0
  %92 = vmatprep.subr.mxu0 0.0
  %93 = vmatpush2.msra.mxu0 0.0
  %94 = vmatprep.subr.mxu0 0.0
  %95 = vmatpush2.msra.mxu0 0.0
  %96 = vmatprep.subr.mxu0 0.0
  %97 = vmatpush2.msra.mxu0 0.0
  %98 = vmatprep.subr.mxu0 0.0
  %99 = vmatpush2.msra.mxu0 0.0
  %100 = vmatprep.subr.mxu0 0.0
  %101 = vmatpush2.msra.mxu0 0.0
  %102 = vmatprep.subr.mxu0 0.0
  %103 = vmatpush2.msra.mxu0 0.0
  %104 = vmatprep.subr.mxu0 0.0
  %105 = vmatpush2.msra.mxu0 0.0
  %106 = vmatprep.subr.mxu0 0.0
  %107 = vmatpush2.msra.mxu0 0.0
  %108 = vmatprep.subr.mxu0 0.0
  %109 = vmatpush2.msra.mxu0 0.0
  %110 = vmatprep.mubr.f32.mxu0 0.0
  %111 = vmatmul.mubr.f32.gmra.mxu0 %v44
  %v112 = vpop.f32.mrf.mxu0
  %v113 = vadd.f32 %v40, %v112
  %v114 = vpop.f32.mrf.mxu0
  %115 = vdwg.mxu0
  %v116 = vmax.f32 %v113, 0.0
  %v117 = vld [vmem:[%s3] sm:$0xff]
  %v118 = vld [vmem:[%s3 + $0x8] sm:$0xff]
  %v119 = vld [vmem:[%s3 + $0x10] sm:$0xff]
  %v120 = vld [vmem:[%s3 + $0x18] sm:$0xff]
  %v121 = vld [vmem:[%s3 + $0x20] sm:$0xff]
  %v122 = vld [vmem:[%s3 + $0x28] sm:$0xff]
  %v123 = vld [vmem:[%s3 + $0x30] sm:$0xff]
  %v124 = vld [vmem:[%s3 + $0x38] sm:$0xff]
  %v125 = vld [vmem:[%s3 + $0x40] sm:$0xff]
  %v126 = vld [vmem:[%s3 + $0x48] sm:$0xff]
  %v127 = vld [vmem:[%s3 + $0x50] sm:$0xff]
  %v128 = vld [vmem:[%s3 + $0x58] sm:$0xff]
  %v129 = vld [vmem:[%s3 + $0x60] sm:$0xff]
  %v130 = vld [vmem:[%s3 + $0x68] sm:$0xff]
  %v131 = vld [vmem:[%s3 + $0x70] sm:$0xff]
  %v132 = vld [vmem:[%s3 + $0x78] sm:$0xff]
  %v133 = vld [vmem:[%s4] sm:$0x1]
  %v135 = vlaneseq
  %v136 = vshrl.u32 %v135, 7
  %v137 = vsub.s32 0, %v136
  %v138 = vrot.slane %v133, %v137
  %140 = vmatprep.subr.mxu0 0.0
  %141 = vmatpush1.msra.mxu0 %v132
  %142 = vmatprep.subr.mxu0 0.0
  %143 = vmatpush1.msra.mxu0 %v131
  %144 = vmatprep.subr.mxu0 0.0
  %145 = vmatpush1.msra.mxu0 %v130
  %146 = vmatprep.subr.mxu0 0.0
  %147 = vmatpush1.msra.mxu0 %v129
  %148 = vmatprep.subr.mxu0 0.0
  %149 = vmatpush1.msra.mxu0 %v128
  %150 = vmatprep.subr.mxu0 0.0
  %151 = vmatpush1.msra.mxu0 %v127
  %152 = vmatprep.subr.mxu0 0.0
  %153 = vmatpush1.msra.mxu0 %v126
  %154 = vmatprep.subr.mxu0 0.0
  %155 = vmatpush1.msra.mxu0 %v125
  %156 = vmatprep.subr.mxu0 0.0
  %157 = vmatpush1.msra.mxu0 %v124
  %158 = vmatprep.subr.mxu0 0.0
  %159 = vmatpush1.msra.mxu0 %v123
  %160 = vmatprep.subr.mxu0 0.0
  %161 = vmatpush1.msra.mxu0 %v122
  %162 = vmatprep.subr.mxu0 0.0
  %163 = vmatpush1.msra.mxu0 %v121
  %164 = vmatprep.subr.mxu0 0.0
  %165 = vmatpush1.msra.mxu0 %v120
  %166 = vmatprep.subr.mxu0 0.0
  %167 = vmatpush1.msra.mxu0 %v119
  %168 = vmatprep.subr.mxu0 0.0
  %169 = vmatpush1.msra.mxu0 %v118
  %170 = vmatprep.subr.mxu0 0.0
  %171 = vmatpush1.msra.mxu0 %v117
  %172 = vmatprep.subr.mxu0 0.0
  %173 = vmatpush2.msra.mxu0 0.0
  %174 = vmatprep.subr.mxu0 0.0
  %175 = vmatpush2.msra.mxu0 0.0
  %176 = vmatprep.subr.mxu0 0.0
  %177 = vmatpush2.msra.mxu0 0.0
  %178 = vmatprep.subr.mxu0 0.0
  %179 = vmatpush2.msra.mxu0 0.0
  %180 = vmatprep.subr.mxu0 0.0
  %181 = vmatpush2.msra.mxu0 0.0
  %182 = vmatprep.subr.mxu0 0.0
  %183 = vmatpush2.msra.mxu0 0.0
  %184 = vmatprep.subr.mxu0 0.0
  %185 = vmatpush2.msra.mxu0 0.0
  %186 = vmatprep.subr.mxu0 0.0
  %187 = vmatpush2.msra.mxu0 0.0
  %188 = vmatprep.subr.mxu0 0.0
  %189 = vmatpush2.msra.mxu0 0.0
  %190 = vmatprep.subr.mxu0 0.0
  %191 = vmatpush2.msra.mxu0 0.0
  %192 = vmatprep.subr.mxu0 0.0
  %193 = vmatpush2.msra.mxu0 0.0
  %194 = vmatprep.subr.mxu0 0.0
  %195 = vmatpush2.msra.mxu0 0.0
  %196 = vmatprep.subr.mxu0 0.0
  %197 = vmatpush2.msra.mxu0 0.0
  %198 = vmatprep.subr.mxu0 0.0
  %199 = vmatpush2.msra.mxu0 0.0
  %200 = vmatprep.subr.mxu0 0.0
  %201 = vmatpush2.msra.mxu0 0.0
  %202 = vmatprep.subr.mxu0 0.0
  %203 = vmatpush2.msra.mxu0 0.0
  %204 = vmatprep.mubr.f32.mxu0 0.0
  %205 = vmatmul.mubr.f32.gmra.mxu0 %v116
  %v206 = vpop.f32.mrf.mxu0
  %v207 = vadd.f32 %v138, %v206
  %v208 = vpop.f32.mrf.mxu0
  %209 = vdwg.mxu0
  %v210 = vmax.f32 %v207, 0.0
  %v211 = vld [vmem:[%s5] sm:$0xff]
  %v212 = vld [vmem:[%s5 + $0x8] sm:$0xff]
  %v213 = vld [vmem:[%s5 + $0x10] sm:$0xff]
  %v214 = vld [vmem:[%s5 + $0x18] sm:$0xff]
  %v215 = vld [vmem:[%s5 + $0x20] sm:$0xff]
  %v216 = vld [vmem:[%s5 + $0x28] sm:$0xff]
  %v217 = vld [vmem:[%s5 + $0x30] sm:$0xff]
  %v218 = vld [vmem:[%s5 + $0x38] sm:$0xff]
  %v219 = vld [vmem:[%s5 + $0x40] sm:$0xff]
  %v220 = vld [vmem:[%s5 + $0x48] sm:$0xff]
  %v221 = vld [vmem:[%s5 + $0x50] sm:$0xff]
  %v222 = vld [vmem:[%s5 + $0x58] sm:$0xff]
  %v223 = vld [vmem:[%s5 + $0x60] sm:$0xff]
  %v224 = vld [vmem:[%s5 + $0x68] sm:$0xff]
  %v225 = vld [vmem:[%s5 + $0x70] sm:$0xff]
  %v226 = vld [vmem:[%s5 + $0x78] sm:$0xff]
  %v227 = vld [vmem:[%s6] sm:$0x1]
  %v229 = vlaneseq
  %v230 = vshrl.u32 %v229, 7
  %v231 = vsub.s32 0, %v230
  %v232 = vrot.slane %v227, %v231
  %234 = vmatprep.subr.mxu0 0.0
  %235 = vmatpush1.msra.mxu0 %v226
  %236 = vmatprep.subr.mxu0 0.0
  %237 = vmatpush1.msra.mxu0 %v225
  %238 = vmatprep.subr.mxu0 0.0
  %239 = vmatpush1.msra.mxu0 %v224
  %240 = vmatprep.subr.mxu0 0.0
  %241 = vmatpush1.msra.mxu0 %v223
  %242 = vmatprep.subr.mxu0 0.0
  %243 = vmatpush1.msra.mxu0 %v222
  %244 = vmatprep.subr.mxu0 0.0
  %245 = vmatpush1.msra.mxu0 %v221
  %246 = vmatprep.subr.mxu0 0.0
  %247 = vmatpush1.msra.mxu0 %v220
  %248 = vmatprep.subr.mxu0 0.0
  %249 = vmatpush1.msra.mxu0 %v219
  %250 = vmatprep.subr.mxu0 0.0
  %251 = vmatpush1.msra.mxu0 %v218
  %252 = vmatprep.subr.mxu0 0.0
  %253 = vmatpush1.msra.mxu0 %v217
  %254 = vmatprep.subr.mxu0 0.0
  %255 = vmatpush1.msra.mxu0 %v216
  %256 = vmatprep.subr.mxu0 0.0
  %257 = vmatpush1.msra.mxu0 %v215
  %258 = vmatprep.subr.mxu0 0.0
  %259 = vmatpush1.msra.mxu0 %v214
  %260 = vmatprep.subr.mxu0 0.0
  %261 = vmatpush1.msra.mxu0 %v213
  %262 = vmatprep.subr.mxu0 0.0
  %263 = vmatpush1.msra.mxu0 %v212
  %264 = vmatprep.subr.mxu0 0.0
  %265 = vmatpush1.msra.mxu0 %v211
  %266 = vmatprep.subr.mxu0 0.0
  %267 = vmatpush2.msra.mxu0 0.0
  %268 = vmatprep.subr.mxu0 0.0
  %269 = vmatpush2.msra.mxu0 0.0
  %270 = vmatprep.subr.mxu0 0.0
  %271 = vmatpush2.msra.mxu0 0.0
  %272 = vmatprep.subr.mxu0 0.0
  %273 = vmatpush2.msra.mxu0 0.0
  %274 = vmatprep.subr.mxu0 0.0
  %275 = vmatpush2.msra.mxu0 0.0
  %276 = vmatprep.subr.mxu0 0.0
  %277 = vmatpush2.msra.mxu0 0.0
  %278 = vmatprep.subr.mxu0 0.0
  %279 = vmatpush2.msra.mxu0 0.0
  %280 = vmatprep.subr.mxu0 0.0
  %281 = vmatpush2.msra.mxu0 0.0
  %282 = vmatprep.subr.mxu0 0.0
  %283 = vmatpush2.msra.mxu0 0.0
  %284 = vmatprep.subr.mxu0 0.0
  %285 = vmatpush2.msra.mxu0 0.0
  %286 = vmatprep.subr.mxu0 0.0
  %287 = vmatpush2.msra.mxu0 0.0
  %288 = vmatprep.subr.mxu0 0.0
  %289 = vmatpush2.msra.mxu0 0.0
  %290 = vmatprep.subr.mxu0 0.0
  %291 = vmatpush2.msra.mxu0 0.0
  %292 = vmatprep.subr.mxu0 0.0
  %293 = vmatpush2.msra.mxu0 0.0
  %294 = vmatprep.subr.mxu0 0.0
  %295 = vmatpush2.msra.mxu0 0.0
  %296 = vmatprep.subr.mxu0 0.0
  %297 = vmatpush2.msra.mxu0 0.0
  %298 = vmatprep.mubr.f32.mxu0 0.0
  %299 = vmatmul.mubr.f32.gmra.mxu0 %v210
  %v300 = vpop.f32.mrf.mxu0
  %v301 = vadd.f32 %v232, %v300
  %v302 = vpop.f32.mrf.mxu0
  %303 = vdwg.mxu0
  %v304 = vmax.f32 %v301, 0.0
  %v305 = vld [vmem:[%s7] sm:$0xff]
  %v306 = vld [vmem:[%s7 + $0x8] sm:$0xff]
  %v307 = vld [vmem:[%s7 + $0x10] sm:$0xff]
  %v308 = vld [vmem:[%s7 + $0x18] sm:$0xff]
  %v309 = vld [vmem:[%s7 + $0x20] sm:$0xff]
  %v310 = vld [vmem:[%s7 + $0x28] sm:$0xff]
  %v311 = vld [vmem:[%s7 + $0x30] sm:$0xff]
  %v312 = vld [vmem:[%s7 + $0x38] sm:$0xff]
  %v313 = vld [vmem:[%s8] sm:$0x1]
  %v315 = vlaneseq
  %v316 = vshrl.u32 %v315, 7
  %v317 = vsub.s32 0, %v316
  %v318 = vrot.slane %v313, %v317
  %vm320 = vcmask 523264
  %v322 = vsel %vm320, %v304, 0
  %324 = vmatprep.subr.mxu0 0.0
  %325 = vmatpush1.msra.mxu0 0.0
  %326 = vmatprep.subr.mxu0 0.0
  %327 = vmatpush1.msra.mxu0 0.0
  %328 = vmatprep.subr.mxu0 0.0
  %329 = vmatpush1.msra.mxu0 0.0
  %330 = vmatprep.subr.mxu0 0.0
  %331 = vmatpush1.msra.mxu0 0.0
  %332 = vmatprep.subr.mxu0 0.0
  %333 = vmatpush1.msra.mxu0 0.0
  %334 = vmatprep.subr.mxu0 0.0
  %335 = vmatpush1.msra.mxu0 0.0
  %336 = vmatprep.subr.mxu0 0.0
  %337 = vmatpush1.msra.mxu0 0.0
  %338 = vmatprep.subr.mxu0 0.0
  %339 = vmatpush1.msra.mxu0 0.0
  %340 = vmatprep.subr.mxu0 0.0
  %341 = vmatpush1.msra.mxu0 %v312
  %342 = vmatprep.subr.mxu0 0.0
  %343 = vmatpush1.msra.mxu0 %v311
  %344 = vmatprep.subr.mxu0 0.0
  %345 = vmatpush1.msra.mxu0 %v310
  %346 = vmatprep.subr.mxu0 0.0
  %347 = vmatpush1.msra.mxu0 %v309
  %348 = vmatprep.subr.mxu0 0.0
  %349 = vmatpush1.msra.mxu0 %v308
  %350 = vmatprep.subr.mxu0 0.0
  %351 = vmatpush1.msra.mxu0 %v307
  %352 = vmatprep.subr.mxu0 0.0
  %353 = vmatpush1.msra.mxu0 %v306
  %354 = vmatprep.subr.mxu0 0.0
  %355 = vmatpush1.msra.mxu0 %v305
  %356 = vmatprep.subr.mxu0 0.0
  %357 = vmatpush2.msra.mxu0 0.0
  %358 = vmatprep.subr.mxu0 0.0
  %359 = vmatpush2.msra.mxu0 0.0
  %360 = vmatprep.subr.mxu0 0.0
  %361 = vmatpush2.msra.mxu0 0.0
  %362 = vmatprep.subr.mxu0 0.0
  %363 = vmatpush2.msra.mxu0 0.0
  %364 = vmatprep.subr.mxu0 0.0
  %365 = vmatpush2.msra.mxu0 0.0
  %366 = vmatprep.subr.mxu0 0.0
  %367 = vmatpush2.msra.mxu0 0.0
  %368 = vmatprep.subr.mxu0 0.0
  %369 = vmatpush2.msra.mxu0 0.0
  %370 = vmatprep.subr.mxu0 0.0
  %371 = vmatpush2.msra.mxu0 0.0
  %372 = vmatprep.subr.mxu0 0.0
  %373 = vmatpush2.msra.mxu0 0.0
  %374 = vmatprep.subr.mxu0 0.0
  %375 = vmatpush2.msra.mxu0 0.0
  %376 = vmatprep.subr.mxu0 0.0
  %377 = vmatpush2.msra.mxu0 0.0
  %378 = vmatprep.subr.mxu0 0.0
  %379 = vmatpush2.msra.mxu0 0.0
  %380 = vmatprep.subr.mxu0 0.0
  %381 = vmatpush2.msra.mxu0 0.0
  %382 = vmatprep.subr.mxu0 0.0
  %383 = vmatpush2.msra.mxu0 0.0
  %384 = vmatprep.subr.mxu0 0.0
  %385 = vmatpush2.msra.mxu0 0.0
  %386 = vmatprep.subr.mxu0 0.0
  %387 = vmatpush2.msra.mxu0 0.0
  %388 = vmatprep.mubr.f32.mxu0 0.0
  %389 = vmatmul.mubr.f32.gmra.mxu0 %v322
  %v390 = vpop.f32.mrf.mxu0
  %v391 = vadd.f32 %v318, %v390
  %v392 = vpop.f32.mrf.mxu0
  %393 = vdwg.mxu0
  %vm394 = vcmask 31744
  %v395 = vsel %vm394, %v391, -inf
  %396 = vmax.xlane.f32.xlu0 %v395
  %v397 = vpop.xlane.xlu0 %396
  %399 = vset.pattern.permute.xlu0 4
  %400 = vperm.xlu0 %399, %v391
  %v401 = vpop.permute.xlu0 %400
  %v403 = vadd.f32 %v401, %v391
  %v404 = vsub.f32 %v403, %v397
  %405 = vst.msk [vmem:[%s9] sm:$0xff] %vm394, %v404
  // Predicated region
  $region38: #{tpu_custom_call.1} parent=0 // pred_check
    _
  $region39: #{tpu_custom_call.1} parent=0 // pred_check_branch
    %407 = sbr.rel (0) target = $region41
  $region40: #{tpu_custom_call.1} parent=0 // pred_region
    _
  $region41: #{tpu_custom_call.1} parent=0 // pred_fallthru
    _
  // Predicated region
  $region42: #{tpu_custom_call.1} parent=0 // pred_check
    _
  $region43: #{tpu_custom_call.1} parent=0 // pred_check_branch
    %409 = sbr.rel (0) target = $region45
  $region44: #{tpu_custom_call.1} parent=0 // pred_region
    _
  $region45: #{tpu_custom_call.1} parent=0 // pred_fallthru
    _

</llo_original>
